<compile_context>
chip_gen: v5e
topology: v5e:2x2
jax: 0.10.0
libtpu: 0.0.40
codegen_flags: <defaults>
</compile_context>

<pallas_src>
import jax
import jax.numpy as jnp
import numpy as np
from jax import lax
from jax.experimental import pallas as pl
from jax.experimental.pallas import tpu as pltpu


def _round_up(x, m):
    return (x + m - 1) // m * m


def _vmem_capacity_bytes():
    """Physical VMEM of the attached TPU; conservative fallback (v7x: 64 MiB/TC)."""
    try:
        return int(pltpu.get_tpu_info().vmem_capacity_bytes)
    except Exception:
        return 64 * 1024 * 1024


def rnn_masking_kernel(max_len_ref,   # scalar prefetch, SMEM, (1,) int32
                       xw_ref,        # (T_TILE, B_TILE, H_P)  == (x@W_ih.T + b)[tok]
                       len_ref,       # (B_TILE, 1) int32 valid lengths
                       whh_ref,       # (H_P, H_P) compute dtype == W_hh.T
                       fcw_ref,       # (H_P, O_P) compute dtype == fc.W.T
                       fcb_ref,       # (1, O_P)   f32           == fc.b
                       out_ref,       # (B_TILE, O_P) f32 logits
                       h_ref,         # VMEM scratch (B_TILE, H_P) compute dtype
                       acc_ref):      # VMEM scratch (B_TILE, H_P) f32 masked sum
    t_blk = pl.program_id(1)
    n_t_blk = pl.num_programs(1)
    t_tile, b_tile, _ = xw_ref.shape

    # Two independent batch sub-tiles => two independent MXU->tanh dependency
    # chains per time step, letting the scheduler overlap MXU and EUP work.
    n_sub = 2 if (b_tile % 16 == 0) else 1
    sub = b_tile // n_sub
    sub_sl = [slice(s * sub, (s + 1) * sub) for s in range(n_sub)]

    # Initialize the recurrent state / masked-sum accumulator at the first
    # time block of every batch block.
    @pl.when(t_blk == 0)
    def _init():
        h_ref[...] = jnp.zeros_like(h_ref)
        acc_ref[...] = jnp.zeros_like(acc_ref)

    t0 = t_blk * t_tile
    max_len = max_len_ref[0]

    # Skip time blocks that lie entirely past the longest valid sequence.
    @pl.when(t0 < max_len)
    def _block():
        lens = len_ref[...]                        # (B_TILE, 1) int32
        whh = whh_ref[...]                         # resident recurrent weights

        def step(i, hs):
            t_abs = t0 + i
            xt = xw_ref[i].astype(jnp.float32)     # (B_TILE, H_P), one vld/step
            mask = (lens > t_abs).astype(jnp.float32)   # (B_TILE, 1)
            new_hs = []
            for s in range(n_sub):
                sl = sub_sl[s]
                # Input projection is pre-folded into xw_ref -> only one
                # matmul sits on the serial critical path.
                pre = xt[sl] + jnp.dot(hs[s], whh,
                                       preferred_element_type=jnp.float32)
                h_new = jnp.tanh(pre)
                # Accumulate straight into VMEM scratch (uses vld/vst slots)
                # instead of carrying acc through the loop (vreg pressure).
                acc_ref[sl] = acc_ref[sl] + h_new * mask[sl]
                new_hs.append(h_new.astype(h_ref.dtype))
            return tuple(new_hs)

        hs = lax.fori_loop(0, t_tile, step,
                           tuple(h_ref[sl] for sl in sub_sl),
                           unroll=min(t_tile, 8))
        for s in range(n_sub):
            h_ref[sub_sl[s]] = hs[s]

    # Final linear layer on the pooled representation, written once per batch
    # block (output block is resident across the time axis).
    @pl.when(t_blk == n_t_blk - 1)
    def _finalize():
        rep = acc_ref[...]
        out_ref[...] = (jnp.dot(rep.astype(fcw_ref.dtype), fcw_ref[...],
                                preferred_element_type=jnp.float32)
                        + fcb_ref[...])


def _pick_tiles(B, T, H_P, stream_itemsize, vmem_capacity,
                b_tile=None, t_tile=None):
    if b_tile is None:
        # Fill the MXU rows (128) when the batch allows it.
        b_tile = min(128, _round_up(B, 8))
    b_tile = max(8, _round_up(min(b_tile, _round_up(B, 8)), 8))
    if t_tile is None:
        # Largest time block whose double-buffered xw stream stays within
        # ~1/4 of physical VMEM (leaves room for weights/scratch/output and is
        # safe under v7x's 64 MiB; v5e/v6e get larger blocks automatically).
        xw_budget = vmem_capacity // 4
        t_tile = 128
        while t_tile > 8 and 2 * t_tile * b_tile * H_P * stream_itemsize > xw_budget:
            t_tile //= 2
    t_tile = max(1, min(t_tile, T))
    return b_tile, t_tile


def rnn_with_masking(x_tokens, lengths, params, *,
                     compute_dtype=jnp.float32, b_tile=None, t_tile=None):
    """x_tokens: (B, T) int32, lengths: (B,) int32 -> logits (B, O)."""
    emb_table, w_ih, w_hh, b_ih, b_hh, fc_w, fc_b = params
    B, T = x_tokens.shape
    H = emb_table.shape[1]
    O = fc_w.shape[0]

    H_P = _round_up(H, 128)             # lane-dense hidden
    O_P = _round_up(O, 128)             # lane-dense output slab (sliced outside)

    # bf16 compute also stores the (T,B,H) stream in bf16 (halves HBM reads);
    # elementwise math (tanh / mask / accumulation) stays f32 in-kernel.
    stream_dtype = jnp.float32 if compute_dtype == jnp.float32 else jnp.bfloat16
    stream_isz = np.dtype(stream_dtype).itemsize
    cdt_isz = np.dtype(compute_dtype).itemsize

    vmem_cap = _vmem_capacity_bytes()
    B_TILE, T_TILE = _pick_tiles(B, T, H_P, stream_isz, vmem_cap,
                                 b_tile=b_tile, t_tile=t_tile)
    # TODO(synk): on v7x (2 TensorCores) prefer B_TILE ~= B_P/2 when B_P <= 128
    # so the parallel batch axis has >= 2 blocks and both cores stay busy.
    B_P = _round_up(B, B_TILE)
    T_P = _round_up(T, T_TILE)

    # ---- Hoisted input projection: Embedding(x)@W_ih.T + b == (E@W_ih.T + b)[x]
    # -> one small (V,H) matmul, then a time-major gather.  Pad the tiny int32
    #    token array (not the large f32 activation) before gathering.
    xw_table = (emb_table @ w_ih.T + (b_ih + b_hh)[None, :]).astype(jnp.float32)
    xw_table = jnp.pad(xw_table, ((0, 0), (0, H_P - H)))              # (V, H_P)
    tok_tm = jnp.pad(x_tokens.T.astype(jnp.int32),
                     ((0, T_P - T), (0, B_P - B)))                    # (T_P, B_P)
    xw = xw_table[tok_tm].astype(stream_dtype)                        # (T_P, B_P, H_P)
    # TODO(synk): move this gather in-kernel (token ids in SMEM + resident
    # (V,H_P) table in VMEM) to cut the dominant HBM stream by ~H_P x.

    lens = jnp.pad(lengths.astype(jnp.int32), (0, B_P - B))[:, None]  # (B_P, 1)
    max_len = jnp.max(lengths).astype(jnp.int32).reshape((1,))

    # Resident MXU operands (optionally bf16 on v6e/v7x).  If bf16 drift
    # through long recurrences matters, keep w_hh in f32: it is resident and
    # off the bandwidth path anyway.
    whh = jnp.pad(w_hh.T, ((0, H_P - H), (0, H_P - H))).astype(compute_dtype)
    fcw = jnp.pad(fc_w.T, ((0, H_P - H), (0, O_P - O))).astype(compute_dtype)
    fcb = jnp.pad(fc_b, (0, O_P - O))[None, :].astype(jnp.float32)

    grid = (B_P // B_TILE, T_P // T_TILE)     # (parallel batch, serial time)
    grid_spec = pltpu.PrefetchScalarGridSpec(
        num_scalar_prefetch=1,
        grid=grid,
        in_specs=[
            pl.BlockSpec((T_TILE, B_TILE, H_P), lambda b, t, ml: (t, b, 0)),
            pl.BlockSpec((B_TILE, 1),           lambda b, t, ml: (b, 0)),
            pl.BlockSpec((H_P, H_P),            lambda b, t, ml: (0, 0)),
            pl.BlockSpec((H_P, O_P),            lambda b, t, ml: (0, 0)),
            pl.BlockSpec((1, O_P),              lambda b, t, ml: (0, 0)),
        ],
        out_specs=pl.BlockSpec((B_TILE, O_P),   lambda b, t, ml: (b, 0)),
        scratch_shapes=[pltpu.VMEM((B_TILE, H_P), compute_dtype),     # h
                        pltpu.VMEM((B_TILE, H_P), jnp.float32)],      # masked sum
    )

    # VMEM budget derived from the actual (double-buffered) blocks + slack,
    # instead of a blanket limit.
    blocks = [
        ((T_TILE, B_TILE, H_P), stream_dtype, 2),
        ((B_TILE, 1), jnp.int32, 2),
        ((H_P, H_P), compute_dtype, 2),
        ((H_P, O_P), compute_dtype, 2),
        ((1, O_P), jnp.float32, 2),
        ((B_TILE, O_P), jnp.float32, 2),      # output block
        ((B_TILE, H_P), compute_dtype, 1),    # h scratch
        ((B_TILE, H_P), jnp.float32, 1),      # acc scratch
    ]
    vmem_need = sum(n * int(np.prod(s)) * np.dtype(d).itemsize
                    for s, d, n in blocks)
    vmem_limit = int(min(vmem_need * 1.5 + (16 << 20), 100 << 20))

    cost = pl.CostEstimate(
        flops=2 * B_P * T_P * H_P * H_P + 2 * B_P * H_P * O_P,
        transcendentals=B_P * T_P * H_P,
        bytes_accessed=(T_P * B_P * H_P * stream_isz + B_P * 4
                        + (H_P * H_P + H_P * O_P) * cdt_isz
                        + O_P * 4 + B_P * O_P * 4),
    )

    out_padded = pl.pallas_call(
        rnn_masking_kernel,
        out_shape=jax.ShapeDtypeStruct((B_P, O_P), jnp.float32),
        grid_spec=grid_spec,
        compiler_params=pltpu.CompilerParams(
            dimension_semantics=("parallel", "arbitrary"),
            vmem_limit_bytes=vmem_limit),
        cost_estimate=cost,
    )(max_len, xw, lens, whh, fcw, fcb)

    return out_padded[:B, :O]


def reference(x_tokens, lengths, params):
    """Pure-JAX f32 reference mirroring the PyTorch forward."""
    emb_table, w_ih, w_hh, b_ih, b_hh, fc_w, fc_b = params
    B, T = x_tokens.shape
    H = emb_table.shape[1]
    embedded = emb_table[x_tokens]                       # (B, T, H)

    def step(h, x_t):
        h_new = jnp.tanh(x_t @ w_ih.T + b_ih + h @ w_hh.T + b_hh)
        return h_new, h_new

    _, outs = lax.scan(step, jnp.zeros((B, H), jnp.float32),
                       jnp.transpose(embedded, (1, 0, 2)))
    outs = jnp.transpose(outs, (1, 0, 2))                # (B, T, H)
    mask = (jnp.arange(T)[None, :] < lengths[:, None]).astype(jnp.float32)
    rep = (outs * mask[:, :, None]).sum(axis=1)
    return rep @ fc_w.T + fc_b


if __name__ == "__main__":
    INPUT_SIZE = 16   # vocab
    HIDDEN = 32
    OUTPUT = 8
    B, T = 2, 8

    key = jax.random.PRNGKey(0)
    keys = jax.random.split(key, 9)

    emb_table = jax.random.normal(keys[0], (INPUT_SIZE, HIDDEN), jnp.float32) * 0.5
    w_ih = jax.random.normal(keys[1], (HIDDEN, HIDDEN), jnp.float32) * 0.2
    w_hh = jax.random.normal(keys[2], (HIDDEN, HIDDEN), jnp.float32) * 0.2
    b_ih = jax.random.normal(keys[3], (HIDDEN,), jnp.float32) * 0.1
    b_hh = jax.random.normal(keys[4], (HIDDEN,), jnp.float32) * 0.1
    fc_w = jax.random.normal(keys[5], (OUTPUT, HIDDEN), jnp.float32) * 0.2
    fc_b = jax.random.normal(keys[6], (OUTPUT,), jnp.float32) * 0.1
    params = (emb_table, w_ih, w_hh, b_ih, b_hh, fc_w, fc_b)

    x_tokens = jax.random.randint(keys[7], (B, T), 0, INPUT_SIZE, jnp.int32)
    # PyTorch's output*mask broadcast requires max(lengths) == T.
    lengths = jnp.array([T, 5], dtype=jnp.int32)

    ref = reference(x_tokens, lengths, params)

    # f32 path (safe on all generations, incl. v5e).
    logits_f32 = jax.block_until_ready(
        rnn_with_masking(x_tokens, lengths, params, compute_dtype=jnp.float32))
    np.testing.assert_allclose(np.asarray(logits_f32), np.asarray(ref),
                               rtol=1e-4, atol=1e-4)

    # bf16 MXU-operand / bf16 HBM-stream / f32-accumulate path (v6e/v7x, and
    # halves the dominant HBM read stream on v5e).
    logits_bf16 = jax.block_until_ready(
        rnn_with_masking(x_tokens, lengths, params, compute_dtype=jnp.bfloat16))
    np.testing.assert_allclose(np.asarray(logits_bf16), np.asarray(ref),
                               rtol=2e-1, atol=2e-1)

    print("KERNEL_OK")
</pallas_src>

<mosaic_0001>
module attributes {stable_mosaic.version = 11 : i64} {
  func.func @rnn_masking_kernel(%arg0: i32, %arg1: i32, %arg2: memref<1xi32, #tpu.memory_space<smem>>, %arg3: memref<8x8x128xf32, #tpu.memory_space<vmem>>, %arg4: memref<8x1xi32, #tpu.memory_space<vmem>>, %arg5: memref<128x128xf32, #tpu.memory_space<vmem>>, %arg6: memref<128x128xf32, #tpu.memory_space<vmem>>, %arg7: memref<1x128xf32, #tpu.memory_space<vmem>>, %arg8: memref<8x128xf32, #tpu.memory_space<vmem>>, %arg9: memref<8x128xf32, #tpu.memory_space<vmem>>, %arg10: memref<8x128xf32, #tpu.memory_space<vmem>>) attributes {dimension_semantics = [#tpu.dimension_semantics<parallel>, #tpu.dimension_semantics<arbitrary>], iteration_bounds = array<i64: 1, 1>, scalar_prefetch = 1 : i64, scratch_operands = 2 : i64, tpu.core_type = #tpu.core_type<tc>, window_params = [{transform_indices = @transform_0, window_bounds = array<i64: 8, 8, 128>}, {transform_indices = @transform_1, window_bounds = array<i64: 8, 1>}, {pipeline_mode = #tpu.pipeline_mode<synchronous>, transform_indices = @transform_2, window_bounds = array<i64: 128, 128>}, {pipeline_mode = #tpu.pipeline_mode<synchronous>, transform_indices = @transform_3, window_bounds = array<i64: 128, 128>}, {pipeline_mode = #tpu.pipeline_mode<synchronous>, transform_indices = @transform_4, window_bounds = array<i64: 1, 128>}, {transform_indices = @transform_5, window_bounds = array<i64: 8, 128>}]} {
    %c0_i32 = arith.constant 0 : i32
    %0 = arith.cmpi eq, %arg1, %c0_i32 : i32
    %1 = arith.extui %0 : i1 to i32
    %c0_i32_0 = arith.constant 0 : i32
    %2 = arith.cmpi ne, %1, %c0_i32_0 : i32
    scf.if %2 {
      %cst = arith.constant 0.000000e+00 : f32
      %11 = vector.broadcast %cst : f32 to vector<8x128xf32>
      %c0_4 = arith.constant 0 : index
      %c0_5 = arith.constant 0 : index
      %12 = vector.load %arg9[%c0_4, %c0_5] : memref<8x128xf32, #tpu.memory_space<vmem>>, vector<8x128xf32>
      tpu.vector_store %arg9[%c0_4, %c0_5], %11 {strides = array<i32>} : memref<8x128xf32, #tpu.memory_space<vmem>>, vector<8x128xf32>,
      %cst_6 = arith.constant 0.000000e+00 : f32
      %13 = vector.broadcast %cst_6 : f32 to vector<8x128xf32>
      %c0_7 = arith.constant 0 : index
      %c0_8 = arith.constant 0 : index
      %14 = vector.load %arg10[%c0_7, %c0_8] : memref<8x128xf32, #tpu.memory_space<vmem>>, vector<8x128xf32>
      tpu.vector_store %arg10[%c0_7, %c0_8], %13 {strides = array<i32>} : memref<8x128xf32, #tpu.memory_space<vmem>>, vector<8x128xf32>,
    } else {
    }
    %c8_i32 = arith.constant 8 : i32
    %3 = arith.muli %arg1, %c8_i32 : i32
    %c0 = arith.constant 0 : index
    %4 = memref.load %arg2[%c0] : memref<1xi32, #tpu.memory_space<smem>>
    %5 = arith.cmpi slt, %3, %4 : i32
    %6 = arith.extui %5 : i1 to i32
    %c0_i32_1 = arith.constant 0 : i32
    %7 = arith.cmpi ne, %6, %c0_i32_1 : i32
    scf.if %7 {
      %c0_4 = arith.constant 0 : index
      %c0_5 = arith.constant 0 : index
      %11 = vector.load %arg4[%c0_4, %c0_5] : memref<8x1xi32, #tpu.memory_space<vmem>>, vector<8x1xi32>
      %c0_6 = arith.constant 0 : index
      %c0_7 = arith.constant 0 : index
      %12 = vector.load %arg5[%c0_6, %c0_7] : memref<128x128xf32, #tpu.memory_space<vmem>>, vector<128x128xf32>
      %c0_8 = arith.constant 0 : index
      %c0_9 = arith.constant 0 : index
      %13 = vector.load %arg9[%c0_8, %c0_9] : memref<8x128xf32, #tpu.memory_space<vmem>>, vector<8x128xf32>
      %c0_i32_10 = arith.constant 0 : i32
      %14 = arith.addi %3, %c0_i32_10 : i32
      %15 = arith.index_cast %c0_i32_10 : i32 to index
      %c0_11 = arith.constant 0 : index
      %c0_12 = arith.constant 0 : index
      %16 = vector.load %arg3[%15, %c0_11, %c0_12] : memref<8x8x128xf32, #tpu.memory_space<vmem>>, vector<1x8x128xf32>
      %17 = vector.shape_cast %16 : vector<1x8x128xf32> to vector<8x128xf32>
      %18 = vector.broadcast %14 : i32 to vector<8x1xi32>
      %19 = arith.cmpi sgt, %11, %18 : vector<8x1xi32>
      %20 = arith.extui %19 : vector<8x1xi1> to vector<8x1xi32>
      %21 = arith.sitofp %20 : vector<8x1xi32> to vector<8x1xf32>
      %cst = arith.constant dense<0.000000e+00> : vector<8x128xf32>
      %22 = tpu.matmul %13, %12, %cst {dimension_numbers = #tpu.dot_dimension_numbers<[1], [0], [0], [1], [0, 0, 1, 1], [], []>} : vector<8x128xf32>, vector<128x128xf32>, vector<8x128xf32> -> vector<8x128xf32>
      %23 = arith.addf %17, %22 : vector<8x128xf32>
      %24 = math.tanh %23 : vector<8x128xf32>
      %c0_13 = arith.constant 0 : index
      %c0_14 = arith.constant 0 : index
      %25 = vector.load %arg10[%c0_13, %c0_14] : memref<8x128xf32, #tpu.memory_space<vmem>>, vector<8x128xf32>
      %26 = vector.broadcast %21 : vector<8x1xf32> to vector<8x128xf32>
      %27 = arith.mulf %24, %26 : vector<8x128xf32>
      %28 = arith.addf %25, %27 : vector<8x128xf32>
      %c0_15 = arith.constant 0 : index
      %c0_16 = arith.constant 0 : index
      %29 = vector.load %arg10[%c0_15, %c0_16] : memref<8x128xf32, #tpu.memory_space<vmem>>, vector<8x128xf32>
      tpu.vector_store %arg10[%c0_15, %c0_16], %28 {strides = array<i32>} : memref<8x128xf32, #tpu.memory_space<vmem>>, vector<8x128xf32>,
      %c1_i32 = arith.constant 1 : i32
      %30 = arith.addi %3, %c1_i32 : i32
      %31 = arith.index_cast %c1_i32 : i32 to index
      %c0_17 = arith.constant 0 : index
      %c0_18 = arith.constant 0 : index
      %32 = vector.load %arg3[%31, %c0_17, %c0_18] : memref<8x8x128xf32, #tpu.memory_space<vmem>>, vector<1x8x128xf32>
      %33 = vector.shape_cast %32 : vector<1x8x128xf32> to vector<8x128xf32>
      %34 = vector.broadcast %30 : i32 to vector<8x1xi32>
      %35 = arith.cmpi sgt, %11, %34 : vector<8x1xi32>
      %36 = arith.extui %35 : vector<8x1xi1> to vector<8x1xi32>
      %37 = arith.sitofp %36 : vector<8x1xi32> to vector<8x1xf32>
      %cst_19 = arith.constant dense<0.000000e+00> : vector<8x128xf32>
      %38 = tpu.matmul %24, %12, %cst_19 {dimension_numbers = #tpu.dot_dimension_numbers<[1], [0], [0], [1], [0, 0, 1, 1], [], []>} : vector<8x128xf32>, vector<128x128xf32>, vector<8x128xf32> -> vector<8x128xf32>
      %39 = arith.addf %33, %38 : vector<8x128xf32>
      %40 = math.tanh %39 : vector<8x128xf32>
      %c0_20 = arith.constant 0 : index
      %c0_21 = arith.constant 0 : index
      %41 = vector.load %arg10[%c0_20, %c0_21] : memref<8x128xf32, #tpu.memory_space<vmem>>, vector<8x128xf32>
      %42 = vector.broadcast %37 : vector<8x1xf32> to vector<8x128xf32>
      %43 = arith.mulf %40, %42 : vector<8x128xf32>
      %44 = arith.addf %41, %43 : vector<8x128xf32>
      %c0_22 = arith.constant 0 : index
      %c0_23 = arith.constant 0 : index
      %45 = vector.load %arg10[%c0_22, %c0_23] : memref<8x128xf32, #tpu.memory_space<vmem>>, vector<8x128xf32>
      tpu.vector_store %arg10[%c0_22, %c0_23], %44 {strides = array<i32>} : memref<8x128xf32, #tpu.memory_space<vmem>>, vector<8x128xf32>,
      %c2_i32 = arith.constant 2 : i32
      %46 = arith.addi %3, %c2_i32 : i32
      %47 = arith.index_cast %c2_i32 : i32 to index
      %c0_24 = arith.constant 0 : index
      %c0_25 = arith.constant 0 : index
      %48 = vector.load %arg3[%47, %c0_24, %c0_25] : memref<8x8x128xf32, #tpu.memory_space<vmem>>, vector<1x8x128xf32>
      %49 = vector.shape_cast %48 : vector<1x8x128xf32> to vector<8x128xf32>
      %50 = vector.broadcast %46 : i32 to vector<8x1xi32>
      %51 = arith.cmpi sgt, %11, %50 : vector<8x1xi32>
      %52 = arith.extui %51 : vector<8x1xi1> to vector<8x1xi32>
      %53 = arith.sitofp %52 : vector<8x1xi32> to vector<8x1xf32>
      %cst_26 = arith.constant dense<0.000000e+00> : vector<8x128xf32>
      %54 = tpu.matmul %40, %12, %cst_26 {dimension_numbers = #tpu.dot_dimension_numbers<[1], [0], [0], [1], [0, 0, 1, 1], [], []>} : vector<8x128xf32>, vector<128x128xf32>, vector<8x128xf32> -> vector<8x128xf32>
      %55 = arith.addf %49, %54 : vector<8x128xf32>
      %56 = math.tanh %55 : vector<8x128xf32>
      %c0_27 = arith.constant 0 : index
      %c0_28 = arith.constant 0 : index
      %57 = vector.load %arg10[%c0_27, %c0_28] : memref<8x128xf32, #tpu.memory_space<vmem>>, vector<8x128xf32>
      %58 = vector.broadcast %53 : vector<8x1xf32> to vector<8x128xf32>
      %59 = arith.mulf %56, %58 : vector<8x128xf32>
      %60 = arith.addf %57, %59 : vector<8x128xf32>
      %c0_29 = arith.constant 0 : index
      %c0_30 = arith.constant 0 : index
      %61 = vector.load %arg10[%c0_29, %c0_30] : memref<8x128xf32, #tpu.memory_space<vmem>>, vector<8x128xf32>
      tpu.vector_store %arg10[%c0_29, %c0_30], %60 {strides = array<i32>} : memref<8x128xf32, #tpu.memory_space<vmem>>, vector<8x128xf32>,
      %c3_i32 = arith.constant 3 : i32
      %62 = arith.addi %3, %c3_i32 : i32
      %63 = arith.index_cast %c3_i32 : i32 to index
      %c0_31 = arith.constant 0 : index
      %c0_32 = arith.constant 0 : index
      %64 = vector.load %arg3[%63, %c0_31, %c0_32] : memref<8x8x128xf32, #tpu.memory_space<vmem>>, vector<1x8x128xf32>
      %65 = vector.shape_cast %64 : vector<1x8x128xf32> to vector<8x128xf32>
      %66 = vector.broadcast %62 : i32 to vector<8x1xi32>
      %67 = arith.cmpi sgt, %11, %66 : vector<8x1xi32>
      %68 = arith.extui %67 : vector<8x1xi1> to vector<8x1xi32>
      %69 = arith.sitofp %68 : vector<8x1xi32> to vector<8x1xf32>
      %cst_33 = arith.constant dense<0.000000e+00> : vector<8x128xf32>
      %70 = tpu.matmul %56, %12, %cst_33 {dimension_numbers = #tpu.dot_dimension_numbers<[1], [0], [0], [1], [0, 0, 1, 1], [], []>} : vector<8x128xf32>, vector<128x128xf32>, vector<8x128xf32> -> vector<8x128xf32>
      %71 = arith.addf %65, %70 : vector<8x128xf32>
      %72 = math.tanh %71 : vector<8x128xf32>
      %c0_34 = arith.constant 0 : index
      %c0_35 = arith.constant 0 : index
      %73 = vector.load %arg10[%c0_34, %c0_35] : memref<8x128xf32, #tpu.memory_space<vmem>>, vector<8x128xf32>
      %74 = vector.broadcast %69 : vector<8x1xf32> to vector<8x128xf32>
      %75 = arith.mulf %72, %74 : vector<8x128xf32>
      %76 = arith.addf %73, %75 : vector<8x128xf32>
      %c0_36 = arith.constant 0 : index
      %c0_37 = arith.constant 0 : index
      %77 = vector.load %arg10[%c0_36, %c0_37] : memref<8x128xf32, #tpu.memory_space<vmem>>, vector<8x128xf32>
      tpu.vector_store %arg10[%c0_36, %c0_37], %76 {strides = array<i32>} : memref<8x128xf32, #tpu.memory_space<vmem>>, vector<8x128xf32>,
      %c4_i32 = arith.constant 4 : i32
      %78 = arith.addi %3, %c4_i32 : i32
      %79 = arith.index_cast %c4_i32 : i32 to index
      %c0_38 = arith.constant 0 : index
      %c0_39 = arith.constant 0 : index
      %80 = vector.load %arg3[%79, %c0_38, %c0_39] : memref<8x8x128xf32, #tpu.memory_space<vmem>>, vector<1x8x128xf32>
      %81 = vector.shape_cast %80 : vector<1x8x128xf32> to vector<8x128xf32>
      %82 = vector.broadcast %78 : i32 to vector<8x1xi32>
      %83 = arith.cmpi sgt, %11, %82 : vector<8x1xi32>
      %84 = arith.extui %83 : vector<8x1xi1> to vector<8x1xi32>
      %85 = arith.sitofp %84 : vector<8x1xi32> to vector<8x1xf32>
      %cst_40 = arith.constant dense<0.000000e+00> : vector<8x128xf32>
      %86 = tpu.matmul %72, %12, %cst_40 {dimension_numbers = #tpu.dot_dimension_numbers<[1], [0], [0], [1], [0, 0, 1, 1], [], []>} : vector<8x128xf32>, vector<128x128xf32>, vector<8x128xf32> -> vector<8x128xf32>
      %87 = arith.addf %81, %86 : vector<8x128xf32>
      %88 = math.tanh %87 : vector<8x128xf32>
      %c0_41 = arith.constant 0 : index
      %c0_42 = arith.constant 0 : index
      %89 = vector.load %arg10[%c0_41, %c0_42] : memref<8x128xf32, #tpu.memory_space<vmem>>, vector<8x128xf32>
      %90 = vector.broadcast %85 : vector<8x1xf32> to vector<8x128xf32>
      %91 = arith.mulf %88, %90 : vector<8x128xf32>
      %92 = arith.addf %89, %91 : vector<8x128xf32>
      %c0_43 = arith.constant 0 : index
      %c0_44 = arith.constant 0 : index
      %93 = vector.load %arg10[%c0_43, %c0_44] : memref<8x128xf32, #tpu.memory_space<vmem>>, vector<8x128xf32>
      tpu.vector_store %arg10[%c0_43, %c0_44], %92 {strides = array<i32>} : memref<8x128xf32, #tpu.memory_space<vmem>>, vector<8x128xf32>,
      %c5_i32 = arith.constant 5 : i32
      %94 = arith.addi %3, %c5_i32 : i32
      %95 = arith.index_cast %c5_i32 : i32 to index
      %c0_45 = arith.constant 0 : index
      %c0_46 = arith.constant 0 : index
      %96 = vector.load %arg3[%95, %c0_45, %c0_46] : memref<8x8x128xf32, #tpu.memory_space<vmem>>, vector<1x8x128xf32>
      %97 = vector.shape_cast %96 : vector<1x8x128xf32> to vector<8x128xf32>
      %98 = vector.broadcast %94 : i32 to vector<8x1xi32>
      %99 = arith.cmpi sgt, %11, %98 : vector<8x1xi32>
      %100 = arith.extui %99 : vector<8x1xi1> to vector<8x1xi32>
      %101 = arith.sitofp %100 : vector<8x1xi32> to vector<8x1xf32>
      %cst_47 = arith.constant dense<0.000000e+00> : vector<8x128xf32>
      %102 = tpu.matmul %88, %12, %cst_47 {dimension_numbers = #tpu.dot_dimension_numbers<[1], [0], [0], [1], [0, 0, 1, 1], [], []>} : vector<8x128xf32>, vector<128x128xf32>, vector<8x128xf32> -> vector<8x128xf32>
      %103 = arith.addf %97, %102 : vector<8x128xf32>
      %104 = math.tanh %103 : vector<8x128xf32>
      %c0_48 = arith.constant 0 : index
      %c0_49 = arith.constant 0 : index
      %105 = vector.load %arg10[%c0_48, %c0_49] : memref<8x128xf32, #tpu.memory_space<vmem>>, vector<8x128xf32>
      %106 = vector.broadcast %101 : vector<8x1xf32> to vector<8x128xf32>
      %107 = arith.mulf %104, %106 : vector<8x128xf32>
      %108 = arith.addf %105, %107 : vector<8x128xf32>
      %c0_50 = arith.constant 0 : index
      %c0_51 = arith.constant 0 : index
      %109 = vector.load %arg10[%c0_50, %c0_51] : memref<8x128xf32, #tpu.memory_space<vmem>>, vector<8x128xf32>
      tpu.vector_store %arg10[%c0_50, %c0_51], %108 {strides = array<i32>} : memref<8x128xf32, #tpu.memory_space<vmem>>, vector<8x128xf32>,
      %c6_i32 = arith.constant 6 : i32
      %110 = arith.addi %3, %c6_i32 : i32
      %111 = arith.index_cast %c6_i32 : i32 to index
      %c0_52 = arith.constant 0 : index
      %c0_53 = arith.constant 0 : index
      %112 = vector.load %arg3[%111, %c0_52, %c0_53] : memref<8x8x128xf32, #tpu.memory_space<vmem>>, vector<1x8x128xf32>
      %113 = vector.shape_cast %112 : vector<1x8x128xf32> to vector<8x128xf32>
      %114 = vector.broadcast %110 : i32 to vector<8x1xi32>
      %115 = arith.cmpi sgt, %11, %114 : vector<8x1xi32>
      %116 = arith.extui %115 : vector<8x1xi1> to vector<8x1xi32>
      %117 = arith.sitofp %116 : vector<8x1xi32> to vector<8x1xf32>
      %cst_54 = arith.constant dense<0.000000e+00> : vector<8x128xf32>
      %118 = tpu.matmul %104, %12, %cst_54 {dimension_numbers = #tpu.dot_dimension_numbers<[1], [0], [0], [1], [0, 0, 1, 1], [], []>} : vector<8x128xf32>, vector<128x128xf32>, vector<8x128xf32> -> vector<8x128xf32>
      %119 = arith.addf %113, %118 : vector<8x128xf32>
      %120 = math.tanh %119 : vector<8x128xf32>
      %c0_55 = arith.constant 0 : index
      %c0_56 = arith.constant 0 : index
      %121 = vector.load %arg10[%c0_55, %c0_56] : memref<8x128xf32, #tpu.memory_space<vmem>>, vector<8x128xf32>
      %122 = vector.broadcast %117 : vector<8x1xf32> to vector<8x128xf32>
      %123 = arith.mulf %120, %122 : vector<8x128xf32>
      %124 = arith.addf %121, %123 : vector<8x128xf32>
      %c0_57 = arith.constant 0 : index
      %c0_58 = arith.constant 0 : index
      %125 = vector.load %arg10[%c0_57, %c0_58] : memref<8x128xf32, #tpu.memory_space<vmem>>, vector<8x128xf32>
      tpu.vector_store %arg10[%c0_57, %c0_58], %124 {strides = array<i32>} : memref<8x128xf32, #tpu.memory_space<vmem>>, vector<8x128xf32>,
      %c7_i32 = arith.constant 7 : i32
      %126 = arith.addi %3, %c7_i32 : i32
      %127 = arith.index_cast %c7_i32 : i32 to index
      %c0_59 = arith.constant 0 : index
      %c0_60 = arith.constant 0 : index
      %128 = vector.load %arg3[%127, %c0_59, %c0_60] : memref<8x8x128xf32, #tpu.memory_space<vmem>>, vector<1x8x128xf32>
      %129 = vector.shape_cast %128 : vector<1x8x128xf32> to vector<8x128xf32>
      %130 = vector.broadcast %126 : i32 to vector<8x1xi32>
      %131 = arith.cmpi sgt, %11, %130 : vector<8x1xi32>
      %132 = arith.extui %131 : vector<8x1xi1> to vector<8x1xi32>
      %133 = arith.sitofp %132 : vector<8x1xi32> to vector<8x1xf32>
      %cst_61 = arith.constant dense<0.000000e+00> : vector<8x128xf32>
      %134 = tpu.matmul %120, %12, %cst_61 {dimension_numbers = #tpu.dot_dimension_numbers<[1], [0], [0], [1], [0, 0, 1, 1], [], []>} : vector<8x128xf32>, vector<128x128xf32>, vector<8x128xf32> -> vector<8x128xf32>
      %135 = arith.addf %129, %134 : vector<8x128xf32>
      %136 = math.tanh %135 : vector<8x128xf32>
      %c0_62 = arith.constant 0 : index
      %c0_63 = arith.constant 0 : index
      %137 = vector.load %arg10[%c0_62, %c0_63] : memref<8x128xf32, #tpu.memory_space<vmem>>, vector<8x128xf32>
      %138 = vector.broadcast %133 : vector<8x1xf32> to vector<8x128xf32>
      %139 = arith.mulf %136, %138 : vector<8x128xf32>
      %140 = arith.addf %137, %139 : vector<8x128xf32>
      %c0_64 = arith.constant 0 : index
      %c0_65 = arith.constant 0 : index
      %141 = vector.load %arg10[%c0_64, %c0_65] : memref<8x128xf32, #tpu.memory_space<vmem>>, vector<8x128xf32>
      tpu.vector_store %arg10[%c0_64, %c0_65], %140 {strides = array<i32>} : memref<8x128xf32, #tpu.memory_space<vmem>>, vector<8x128xf32>,
      %c8_i32_66 = arith.constant 8 : i32
      %c0_67 = arith.constant 0 : index
      %c0_68 = arith.constant 0 : index
      %142 = vector.load %arg9[%c0_67, %c0_68] : memref<8x128xf32, #tpu.memory_space<vmem>>, vector<8x128xf32>
      tpu.vector_store %arg9[%c0_67, %c0_68], %136 {strides = array<i32>} : memref<8x128xf32, #tpu.memory_space<vmem>>, vector<8x128xf32>,
    } else {
    }
    %c0_i32_2 = arith.constant 0 : i32
    %8 = arith.cmpi eq, %arg1, %c0_i32_2 : i32
    %9 = arith.extui %8 : i1 to i32
    %c0_i32_3 = arith.constant 0 : i32
    %10 = arith.cmpi ne, %9, %c0_i32_3 : i32
    scf.if %10 {
      %c0_4 = arith.constant 0 : index
      %c0_5 = arith.constant 0 : index
      %11 = vector.load %arg10[%c0_4, %c0_5] : memref<8x128xf32, #tpu.memory_space<vmem>>, vector<8x128xf32>
      %c0_6 = arith.constant 0 : index
      %c0_7 = arith.constant 0 : index
      %12 = vector.load %arg6[%c0_6, %c0_7] : memref<128x128xf32, #tpu.memory_space<vmem>>, vector<128x128xf32>
      %cst = arith.constant dense<0.000000e+00> : vector<8x128xf32>
      %13 = tpu.matmul %11, %12, %cst {dimension_numbers = #tpu.dot_dimension_numbers<[1], [0], [0], [1], [0, 0, 1, 1], [], []>} : vector<8x128xf32>, vector<128x128xf32>, vector<8x128xf32> -> vector<8x128xf32>
      %c0_8 = arith.constant 0 : index
      %c0_9 = arith.constant 0 : index
      %14 = vector.load %arg7[%c0_8, %c0_9] : memref<1x128xf32, #tpu.memory_space<vmem>>, vector<1x128xf32>
      %15 = vector.broadcast %14 : vector<1x128xf32> to vector<8x128xf32>
      %16 = arith.addf %13, %15 : vector<8x128xf32>
      %c0_10 = arith.constant 0 : index
      %c0_11 = arith.constant 0 : index
      %17 = vector.load %arg8[%c0_10, %c0_11] : memref<8x128xf32, #tpu.memory_space<vmem>>, vector<8x128xf32>
      tpu.vector_store %arg8[%c0_10, %c0_11], %16 {strides = array<i32>} : memref<8x128xf32, #tpu.memory_space<vmem>>, vector<8x128xf32>,
    } else {
    }
    return
  }
  func.func @transform_0(%arg0: i32, %arg1: i32, %arg2: memref<1xi32, #tpu.memory_space<smem>>) -> (i32, i32, i32) {
    %c0_i32 = arith.constant 0 : i32
    %c0_i32_0 = arith.constant 0 : i32
    return %arg1, %arg0, %c0_i32 : i32, i32, i32
  }
  func.func @transform_1(%arg0: i32, %arg1: i32, %arg2: memref<1xi32, #tpu.memory_space<smem>>) -> (i32, i32) {
    %c0_i32 = arith.constant 0 : i32
    %c0_i32_0 = arith.constant 0 : i32
    return %arg0, %c0_i32 : i32, i32
  }
  func.func @transform_2(%arg0: i32, %arg1: i32, %arg2: memref<1xi32, #tpu.memory_space<smem>>) -> (i32, i32) {
    %c0_i32 = arith.constant 0 : i32
    %c0_i32_0 = arith.constant 0 : i32
    %c0_i32_1 = arith.constant 0 : i32
    return %c0_i32, %c0_i32_0 : i32, i32
  }
  func.func @transform_3(%arg0: i32, %arg1: i32, %arg2: memref<1xi32, #tpu.memory_space<smem>>) -> (i32, i32) {
    %c0_i32 = arith.constant 0 : i32
    %c0_i32_0 = arith.constant 0 : i32
    %c0_i32_1 = arith.constant 0 : i32
    return %c0_i32, %c0_i32_0 : i32, i32
  }
  func.func @transform_4(%arg0: i32, %arg1: i32, %arg2: memref<1xi32, #tpu.memory_space<smem>>) -> (i32, i32) {
    %c0_i32 = arith.constant 0 : i32
    %c0_i32_0 = arith.constant 0 : i32
    %c0_i32_1 = arith.constant 0 : i32
    return %c0_i32, %c0_i32_0 : i32, i32
  }
  func.func @transform_5(%arg0: i32, %arg1: i32, %arg2: memref<1xi32, #tpu.memory_space<smem>>) -> (i32, i32) {
    %c0_i32 = arith.constant 0 : i32
    %c0_i32_0 = arith.constant 0 : i32
    return %arg0, %c0_i32 : i32, i32
  }
}

</mosaic_0001>

<llo_original>
// kernel: tpu_custom_call.1
$region0: #{tpu_custom_call.1}
  #allocation0 [shape = 'u32[]', space=smem, size = 0x4, offset = 0x4, fixed_abs, tag = 'smem constant byte address 0x4 - core index']
  #allocation1 [shape = 'u32[72,128]{1,0:T(1,128)}', space=vmem, size = 0x9000, scoped, tag = 'internal scratch']
  #allocation2 [shape = 'f32[8,128]{1,0:T(8,128)}', space=vmem, size = 0x1000, scoped, tag = 'scratch operand']
  #allocation3 [shape = 'f32[8,128]{1,0:T(8,128)}', space=vmem, size = 0x1000, scoped, tag = 'scratch operand']
  #allocation4 [shape = 's32[1]{0}', space=sflag, size = 0x4, scoped, tag = 'scoped memory for tpu_custom_call.1']
  #allocation5 [shape = 's32[1]{0:T(128)S(6)}', space=smem, size = 0x200, scoped, tag = 'prefetched SMEM operand 0']
  %s0 = inlined_call_operand.<no memory space> [shape: s32[1], index: 0, kind: input, shape index: {}]
  %s1 = inlined_call_operand.hbm [shape: f32[8,8,128], index: 1, kind: input, shape index: {}]
  %s2 = inlined_call_operand.vmem [shape: s32[8,1], index: 2, kind: input, shape index: {}]
  %s3 = inlined_call_operand.hbm [shape: f32[128,128], index: 3, kind: input, shape index: {}]
  %s4 = inlined_call_operand.hbm [shape: f32[128,128], index: 4, kind: input, shape index: {}]
  %s5 = inlined_call_operand.vmem [shape: f32[1,128], index: 5, kind: input, shape index: {}]
  %s6 = inlined_call_operand.hbm [shape: f32[8,128], index: 6, kind: output, shape index: {}]
  %s7 = sld [smem:[#allocation0]]
  $region54: #{tpu_custom_call.1} parent=0
    _
  %s9 = ssub.s32 1, %s7
  %s10 = scalar_select 0, %s9, %s7
  %11 = sst [smem:[#allocation5]] %s0
  $region1: #{tpu_custom_call.1} parent=0
    #allocation6 [shape = 'u8[32768]{0}', space=vmem, size = 0x8000, scoped, tag = 'input window, operand 1, single buffered']
    #allocation7 [shape = 's32[1]{0}', space=sflag, size = 0x4, scoped, tag = 'scoped memory for tpu_custom_call.1']
    #allocation8 [shape = 's32[1]{0}', space=sflag, size = 0x4, scoped, tag = 'scoped memory for tpu_custom_call.1']
    #allocation9 [shape = 'u8[65536]{0}', space=vmem, size = 0x10000, scoped, tag = 'input window, operand 3, single buffered']
    #allocation10 [shape = 's32[1]{0}', space=sflag, size = 0x4, scoped, tag = 'scoped memory for tpu_custom_call.1']
    #allocation11 [shape = 'u8[65536]{0}', space=vmem, size = 0x10000, scoped, tag = 'input window, operand 4, single buffered']
    #allocation12 [shape = 'u8[4096]{0}', space=vmem, size = 0x1000, scoped, tag = 'output window, operand 0, single buffered']
    %12 = vsyncpa [#allocation7], 0
    %13 = vsyncpa [#allocation10], 0
    %14 = vsyncpa [#allocation8], 0
    // Predicated region
    $region2: #{tpu_custom_call.1} parent=1 // pred_check
      _
    $region3: #{tpu_custom_call.1} parent=1 // pred_check_branch
      %16 = sbr.rel (0) target = $region5
    $region4: #{tpu_custom_call.1} parent=1 // pred_region
      %18 = vsyncadd [#allocation7], 0
      %s19 = sshll.u32 %s1, 4
      %s20 = int_to_ptr.hbm [resolvable:$true] %s19
      %s21 = sshll.u32 [#allocation6], 4
      %s22 = int_to_ptr.vmem [resolvable:$true] %s21
      %27 = dma.hbm_to_vmem [thread:$0]  %s20, 1024, %s22, [#allocation7], 128, 128, 8
    $region5: #{tpu_custom_call.1} parent=1 // pred_fallthru
      _
    // Predicated region
    $region6: #{tpu_custom_call.1} parent=1 // pred_check
      _
    $region7: #{tpu_custom_call.1} parent=1 // pred_check_branch
      %29 = sbr.rel (0) target = $region9
    $region8: #{tpu_custom_call.1} parent=1 // pred_region
      _
    $region9: #{tpu_custom_call.1} parent=1 // pred_fallthru
      _
    // Predicated region
    $region10: #{tpu_custom_call.1} parent=1 // pred_check
      _
    $region11: #{tpu_custom_call.1} parent=1 // pred_check_branch
      %31 = sbr.rel (0) target = $region13
    $region12: #{tpu_custom_call.1} parent=1 // pred_region
      %33 = vsyncadd [#allocation10], 0
      %s34 = sshll.u32 %s3, 4
      %s35 = int_to_ptr.hbm [resolvable:$true] %s34
      %s36 = sshll.u32 [#allocation9], 4
      %s37 = int_to_ptr.vmem [resolvable:$true] %s36
      %42 = dma.hbm_to_vmem [thread:$0]  %s35, 2048, %s37, [#allocation10], 128, 128, 8
    $region13: #{tpu_custom_call.1} parent=1 // pred_fallthru
      _
    // Predicated region
    $region14: #{tpu_custom_call.1} parent=1 // pred_check
      _
    $region15: #{tpu_custom_call.1} parent=1 // pred_check_branch
      %44 = sbr.rel (0) target = $region17
    $region16: #{tpu_custom_call.1} parent=1 // pred_region
      %46 = vsyncadd [#allocation10], 0
      %s47 = sshll.u32 %s4, 4
      %s48 = int_to_ptr.hbm [resolvable:$true] %s47
      %s49 = sshll.u32 [#allocation11], 4
      %s50 = int_to_ptr.vmem [resolvable:$true] %s49
      %55 = dma.hbm_to_vmem [thread:$0]  %s48, 2048, %s50, [#allocation10], 128, 128, 8
    $region17: #{tpu_custom_call.1} parent=1 // pred_fallthru
      _
    // Predicated region
    $region18: #{tpu_custom_call.1} parent=1 // pred_check
      _
    $region19: #{tpu_custom_call.1} parent=1 // pred_check_branch
      %57 = sbr.rel (0) target = $region21
    $region20: #{tpu_custom_call.1} parent=1 // pred_region
      _
    $region21: #{tpu_custom_call.1} parent=1 // pred_fallthru
      _
    // Predicated region
    $region22: #{tpu_custom_call.1} parent=1 // pred_check
      _
    $region23: #{tpu_custom_call.1} parent=1 // pred_check_branch
      %59 = sbr.rel (0) target = $region25
    $region24: #{tpu_custom_call.1} parent=1 // pred_region
      %61 = dma.done [#allocation7], 1024
    $region25: #{tpu_custom_call.1} parent=1 // pred_fallthru
      _
    // Predicated region
    $region26: #{tpu_custom_call.1} parent=1 // pred_check
      _
    $region27: #{tpu_custom_call.1} parent=1 // pred_check_branch
      %63 = sbr.rel (0) target = $region29
    $region28: #{tpu_custom_call.1} parent=1 // pred_region
      %65 = dma.done [#allocation10], 2048
    $region29: #{tpu_custom_call.1} parent=1 // pred_fallthru
      _
    // Predicated region
    $region30: #{tpu_custom_call.1} parent=1 // pred_check
      _
    $region31: #{tpu_custom_call.1} parent=1 // pred_check_branch
      %67 = sbr.rel (0) target = $region33
    $region32: #{tpu_custom_call.1} parent=1 // pred_region
      %69 = dma.done [#allocation10], 2048
    $region33: #{tpu_custom_call.1} parent=1 // pred_fallthru
      _
    %p70 = scmp.eq.s32.totalorder 0, 0
    // Predicated region
    $region34: #{tpu_custom_call.1} parent=1 // pred_check
      %p71 = pneg %p70
    $region35: #{tpu_custom_call.1} parent=1 // pred_check_branch
      %73 = sbr.rel (%p71) target = $region37
    $region36: #{tpu_custom_call.1} parent=1 // pred_region
      %74 = vst [vmem:[#allocation2] sm:$0xff] 0.0
      %75 = vst [vmem:[#allocation3] sm:$0xff] 0.0
    $region37: #{tpu_custom_call.1} parent=1 // pred_fallthru
      _
    %s76 = smul.u32 0, 8
    %s77 = sld [smem:[#allocation5]]
    %p78 = scmp.lt.s32.totalorder %s76, %s77
    // Predicated region
    $region38: #{tpu_custom_call.1} parent=1 // pred_check
      %p79 = pneg %p78
    $region39: #{tpu_custom_call.1} parent=1 // pred_check_branch
      %81 = sbr.rel (%p79) target = $region41
    $region40: #{tpu_custom_call.1} parent=1 // pred_region
      %v82 = vld [vmem:[%s2] sm:$0xff]
      %v83 = vld [vmem:[#allocation9] sm:$0xff]
      %v84 = vld [vmem:[#allocation9 + $0x8] sm:$0xff]
      %v85 = vld [vmem:[#allocation9 + $0x10] sm:$0xff]
      %v86 = vld [vmem:[#allocation9 + $0x18] sm:$0xff]
      %v87 = vld [vmem:[#allocation9 + $0x20] sm:$0xff]
      %v88 = vld [vmem:[#allocation9 + $0x28] sm:$0xff]
      %v89 = vld [vmem:[#allocation9 + $0x30] sm:$0xff]
      %v90 = vld [vmem:[#allocation9 + $0x38] sm:$0xff]
      %v91 = vld [vmem:[#allocation9 + $0x40] sm:$0xff]
      %v92 = vld [vmem:[#allocation9 + $0x48] sm:$0xff]
      %v93 = vld [vmem:[#allocation9 + $0x50] sm:$0xff]
      %v94 = vld [vmem:[#allocation9 + $0x58] sm:$0xff]
      %v95 = vld [vmem:[#allocation9 + $0x60] sm:$0xff]
      %v96 = vld [vmem:[#allocation9 + $0x68] sm:$0xff]
      %v97 = vld [vmem:[#allocation9 + $0x70] sm:$0xff]
      %v98 = vld [vmem:[#allocation9 + $0x78] sm:$0xff]
      %v99 = vld [vmem:[#allocation2] sm:$0xff]
      %v100 = vld [vmem:[#allocation6] sm:$0xff]
      %v101 = vstv %s76
      %vm102 = vcmp.gt.s32.totalorder %v82, %v101
      %v103 = vsel %vm102, 1, 0
      %v104 = vcvt.s32.f32 %v103
      %105 = vmatpush.msra.mxu0 %v98
      %106 = vmatpush.msra.mxu0 %v97
      %107 = vmatpush.msra.mxu0 %v96
      %108 = vmatpush.msra.mxu0 %v95
      %109 = vmatpush.msra.mxu0 %v94
      %110 = vmatpush.msra.mxu0 %v93
      %111 = vmatpush.msra.mxu0 %v92
      %112 = vmatpush.msra.mxu0 %v91
      %113 = vmatpush.msra.mxu0 %v90
      %114 = vmatpush.msra.mxu0 %v89
      %115 = vmatpush.msra.mxu0 %v88
      %116 = vmatpush.msra.mxu0 %v87
      %117 = vmatpush.msra.mxu0 %v86
      %118 = vmatpush.msra.mxu0 %v85
      %119 = vmatpush.msra.mxu0 %v84
      %120 = vmatpush.msra.mxu0 %v83
      %121 = vmatmul.f32.gmra.mxu0 %v99
      %v122 = vpop.f32.mrf.mxu0
      %v123 = vadd.f32 0.0, %v122
      %124 = vdwg.mxu0
      %v125 = vadd.f32 %v100, %v123
      %v126 = vtanh.pop %v125
      %v127 = vld [vmem:[#allocation3] sm:$0xff]
      %129 = vset.pattern.permute.xlu0 0
      %130 = vperm.xlu0 %129, %v104
      %v131 = vpop.permute.xlu0 %130
      %v133 = vmul.f32 %v126, %v131
      %v134 = vadd.f32 %v127, %v133
      %135 = vst [vmem:[#allocation3] sm:$0xff] %v134
      %s136 = sadd.s32 %s76, 1
      %s137 = scalar_lea.vmem [#allocation6], 8
      %v138 = vld [vmem:[%s137] sm:$0xff]
      %v139 = vstv %s136
      %vm140 = vcmp.gt.s32.totalorder %v82, %v139
      %v141 = vsel %vm140, 1, 0
      %v142 = vcvt.s32.f32 %v141
      %143 = vmatpush.msra.mxu0 %v98
      %144 = vmatpush.msra.mxu0 %v97
      %145 = vmatpush.msra.mxu0 %v96
      %146 = vmatpush.msra.mxu0 %v95
      %147 = vmatpush.msra.mxu0 %v94
      %148 = vmatpush.msra.mxu0 %v93
      %149 = vmatpush.msra.mxu0 %v92
      %150 = vmatpush.msra.mxu0 %v91
      %151 = vmatpush.msra.mxu0 %v90
      %152 = vmatpush.msra.mxu0 %v89
      %153 = vmatpush.msra.mxu0 %v88
      %154 = vmatpush.msra.mxu0 %v87
      %155 = vmatpush.msra.mxu0 %v86
      %156 = vmatpush.msra.mxu0 %v85
      %157 = vmatpush.msra.mxu0 %v84
      %158 = vmatpush.msra.mxu0 %v83
      %159 = vmatmul.f32.gmra.mxu0 %v126
      %v160 = vpop.f32.mrf.mxu0
      %v161 = vadd.f32 0.0, %v160
      %162 = vdwg.mxu0
      %v163 = vadd.f32 %v138, %v161
      %v164 = vtanh.pop %v163
      %v165 = vld [vmem:[#allocation3] sm:$0xff]
      %167 = vset.pattern.permute.xlu0 0
      %168 = vperm.xlu0 %167, %v142
      %v169 = vpop.permute.xlu0 %168
      %v171 = vmul.f32 %v164, %v169
      %v172 = vadd.f32 %v165, %v171
      %173 = vst [vmem:[#allocation3] sm:$0xff] %v172
      %s174 = sadd.s32 %s76, 2
      %s175 = scalar_lea.vmem [#allocation6], 16
      %v176 = vld [vmem:[%s175] sm:$0xff]
      %v177 = vstv %s174
      %vm178 = vcmp.gt.s32.totalorder %v82, %v177
      %v179 = vsel %vm178, 1, 0
      %v180 = vcvt.s32.f32 %v179
      %181 = vmatpush.msra.mxu0 %v98
      %182 = vmatpush.msra.mxu0 %v97
      %183 = vmatpush.msra.mxu0 %v96
      %184 = vmatpush.msra.mxu0 %v95
      %185 = vmatpush.msra.mxu0 %v94
      %186 = vmatpush.msra.mxu0 %v93
      %187 = vmatpush.msra.mxu0 %v92
      %188 = vmatpush.msra.mxu0 %v91
      %189 = vmatpush.msra.mxu0 %v90
      %190 = vmatpush.msra.mxu0 %v89
      %191 = vmatpush.msra.mxu0 %v88
      %192 = vmatpush.msra.mxu0 %v87
      %193 = vmatpush.msra.mxu0 %v86
      %194 = vmatpush.msra.mxu0 %v85
      %195 = vmatpush.msra.mxu0 %v84
      %196 = vmatpush.msra.mxu0 %v83
      %197 = vmatmul.f32.gmra.mxu0 %v164
      %v198 = vpop.f32.mrf.mxu0
      %v199 = vadd.f32 0.0, %v198
      %200 = vdwg.mxu0
      %v201 = vadd.f32 %v176, %v199
      %v202 = vtanh.pop %v201
      %v203 = vld [vmem:[#allocation3] sm:$0xff]
      %205 = vset.pattern.permute.xlu0 0
      %206 = vperm.xlu0 %205, %v180
      %v207 = vpop.permute.xlu0 %206
      %v209 = vmul.f32 %v202, %v207
      %v210 = vadd.f32 %v203, %v209
      %211 = vst [vmem:[#allocation3] sm:$0xff] %v210
      %s212 = sadd.s32 %s76, 3
      %s213 = scalar_lea.vmem [#allocation6], 24
      %v214 = vld [vmem:[%s213] sm:$0xff]
      %v215 = vstv %s212
      %vm216 = vcmp.gt.s32.totalorder %v82, %v215
      %v217 = vsel %vm216, 1, 0
      %v218 = vcvt.s32.f32 %v217
      %219 = vmatpush.msra.mxu0 %v98
      %220 = vmatpush.msra.mxu0 %v97
      %221 = vmatpush.msra.mxu0 %v96
      %222 = vmatpush.msra.mxu0 %v95
      %223 = vmatpush.msra.mxu0 %v94
      %224 = vmatpush.msra.mxu0 %v93
      %225 = vmatpush.msra.mxu0 %v92
      %226 = vmatpush.msra.mxu0 %v91
      %227 = vmatpush.msra.mxu0 %v90
      %228 = vmatpush.msra.mxu0 %v89
      %229 = vmatpush.msra.mxu0 %v88
      %230 = vmatpush.msra.mxu0 %v87
      %231 = vmatpush.msra.mxu0 %v86
      %232 = vmatpush.msra.mxu0 %v85
      %233 = vmatpush.msra.mxu0 %v84
      %234 = vmatpush.msra.mxu0 %v83
      %235 = vmatmul.f32.gmra.mxu0 %v202
      %v236 = vpop.f32.mrf.mxu0
      %v237 = vadd.f32 0.0, %v236
      %238 = vdwg.mxu0
      %v239 = vadd.f32 %v214, %v237
      %v240 = vtanh.pop %v239
      %v241 = vld [vmem:[#allocation3] sm:$0xff]
      %243 = vset.pattern.permute.xlu0 0
      %244 = vperm.xlu0 %243, %v218
      %v245 = vpop.permute.xlu0 %244
      %v247 = vmul.f32 %v240, %v245
      %v248 = vadd.f32 %v241, %v247
      %249 = vst [vmem:[#allocation3] sm:$0xff] %v248
      %s250 = sadd.s32 %s76, 4
      %s251 = scalar_lea.vmem [#allocation6], 32
      %v252 = vld [vmem:[%s251] sm:$0xff]
      %v253 = vstv %s250
      %vm254 = vcmp.gt.s32.totalorder %v82, %v253
      %v255 = vsel %vm254, 1, 0
      %v256 = vcvt.s32.f32 %v255
      %257 = vmatpush.msra.mxu0 %v98
      %258 = vmatpush.msra.mxu0 %v97
      %259 = vmatpush.msra.mxu0 %v96
      %260 = vmatpush.msra.mxu0 %v95
      %261 = vmatpush.msra.mxu0 %v94
      %262 = vmatpush.msra.mxu0 %v93
      %263 = vmatpush.msra.mxu0 %v92
      %264 = vmatpush.msra.mxu0 %v91
      %265 = vmatpush.msra.mxu0 %v90
      %266 = vmatpush.msra.mxu0 %v89
      %267 = vmatpush.msra.mxu0 %v88
      %268 = vmatpush.msra.mxu0 %v87
      %269 = vmatpush.msra.mxu0 %v86
      %270 = vmatpush.msra.mxu0 %v85
      %271 = vmatpush.msra.mxu0 %v84
      %272 = vmatpush.msra.mxu0 %v83
      %273 = vmatmul.f32.gmra.mxu0 %v240
      %v274 = vpop.f32.mrf.mxu0
      %v275 = vadd.f32 0.0, %v274
      %276 = vdwg.mxu0
      %v277 = vadd.f32 %v252, %v275
      %v278 = vtanh.pop %v277
      %v279 = vld [vmem:[#allocation3] sm:$0xff]
      %281 = vset.pattern.permute.xlu0 0
      %282 = vperm.xlu0 %281, %v256
      %v283 = vpop.permute.xlu0 %282
      %v285 = vmul.f32 %v278, %v283
      %v286 = vadd.f32 %v279, %v285
      %287 = vst [vmem:[#allocation3] sm:$0xff] %v286
      %s288 = sadd.s32 %s76, 5
      %s289 = scalar_lea.vmem [#allocation6], 40
      %v290 = vld [vmem:[%s289] sm:$0xff]
      %v291 = vstv %s288
      %vm292 = vcmp.gt.s32.totalorder %v82, %v291
      %v293 = vsel %vm292, 1, 0
      %v294 = vcvt.s32.f32 %v293
      %295 = vmatpush.msra.mxu0 %v98
      %296 = vmatpush.msra.mxu0 %v97
      %297 = vmatpush.msra.mxu0 %v96
      %298 = vmatpush.msra.mxu0 %v95
      %299 = vmatpush.msra.mxu0 %v94
      %300 = vmatpush.msra.mxu0 %v93
      %301 = vmatpush.msra.mxu0 %v92
      %302 = vmatpush.msra.mxu0 %v91
      %303 = vmatpush.msra.mxu0 %v90
      %304 = vmatpush.msra.mxu0 %v89
      %305 = vmatpush.msra.mxu0 %v88
      %306 = vmatpush.msra.mxu0 %v87
      %307 = vmatpush.msra.mxu0 %v86
      %308 = vmatpush.msra.mxu0 %v85
      %309 = vmatpush.msra.mxu0 %v84
      %310 = vmatpush.msra.mxu0 %v83
      %311 = vmatmul.f32.gmra.mxu0 %v278
      %v312 = vpop.f32.mrf.mxu0
      %v313 = vadd.f32 0.0, %v312
      %314 = vdwg.mxu0
      %v315 = vadd.f32 %v290, %v313
      %v316 = vtanh.pop %v315
      %v317 = vld [vmem:[#allocation3] sm:$0xff]
      %319 = vset.pattern.permute.xlu0 0
      %320 = vperm.xlu0 %319, %v294
      %v321 = vpop.permute.xlu0 %320
      %v323 = vmul.f32 %v316, %v321
      %v324 = vadd.f32 %v317, %v323
      %325 = vst [vmem:[#allocation3] sm:$0xff] %v324
      %s326 = sadd.s32 %s76, 6
      %s327 = scalar_lea.vmem [#allocation6], 48
      %v328 = vld [vmem:[%s327] sm:$0xff]
      %v329 = vstv %s326
      %vm330 = vcmp.gt.s32.totalorder %v82, %v329
      %v331 = vsel %vm330, 1, 0
      %v332 = vcvt.s32.f32 %v331
      %333 = vmatpush.msra.mxu0 %v98
      %334 = vmatpush.msra.mxu0 %v97
      %335 = vmatpush.msra.mxu0 %v96
      %336 = vmatpush.msra.mxu0 %v95
      %337 = vmatpush.msra.mxu0 %v94
      %338 = vmatpush.msra.mxu0 %v93
      %339 = vmatpush.msra.mxu0 %v92
      %340 = vmatpush.msra.mxu0 %v91
      %341 = vmatpush.msra.mxu0 %v90
      %342 = vmatpush.msra.mxu0 %v89
      %343 = vmatpush.msra.mxu0 %v88
      %344 = vmatpush.msra.mxu0 %v87
      %345 = vmatpush.msra.mxu0 %v86
      %346 = vmatpush.msra.mxu0 %v85
      %347 = vmatpush.msra.mxu0 %v84
      %348 = vmatpush.msra.mxu0 %v83
      %349 = vmatmul.f32.gmra.mxu0 %v316
      %v350 = vpop.f32.mrf.mxu0
      %v351 = vadd.f32 0.0, %v350
      %352 = vdwg.mxu0
      %v353 = vadd.f32 %v328, %v351
      %v354 = vtanh.pop %v353
      %v355 = vld [vmem:[#allocation3] sm:$0xff]
      %357 = vset.pattern.permute.xlu0 0
      %358 = vperm.xlu0 %357, %v332
      %v359 = vpop.permute.xlu0 %358
      %v361 = vmul.f32 %v354, %v359
      %v362 = vadd.f32 %v355, %v361
      %363 = vst [vmem:[#allocation3] sm:$0xff] %v362
      %s364 = sadd.s32 %s76, 7
      %s365 = scalar_lea.vmem [#allocation6], 56
      %v366 = vld [vmem:[%s365] sm:$0xff]
      %v367 = vstv %s364
      %vm368 = vcmp.gt.s32.totalorder %v82, %v367
      %v369 = vsel %vm368, 1, 0
      %v370 = vcvt.s32.f32 %v369
      %371 = vmatpush.msra.mxu0 %v98
      %372 = vmatpush.msra.mxu0 %v97
      %373 = vmatpush.msra.mxu0 %v96
      %374 = vmatpush.msra.mxu0 %v95
      %375 = vmatpush.msra.mxu0 %v94
      %376 = vmatpush.msra.mxu0 %v93
      %377 = vmatpush.msra.mxu0 %v92
      %378 = vmatpush.msra.mxu0 %v91
      %379 = vmatpush.msra.mxu0 %v90
      %380 = vmatpush.msra.mxu0 %v89
      %381 = vmatpush.msra.mxu0 %v88
      %382 = vmatpush.msra.mxu0 %v87
      %383 = vmatpush.msra.mxu0 %v86
      %384 = vmatpush.msra.mxu0 %v85
      %385 = vmatpush.msra.mxu0 %v84
      %386 = vmatpush.msra.mxu0 %v83
      %387 = vmatmul.f32.gmra.mxu0 %v354
      %v388 = vpop.f32.mrf.mxu0
      %v389 = vadd.f32 0.0, %v388
      %390 = vdwg.mxu0
      %v391 = vadd.f32 %v366, %v389
      %v392 = vtanh.pop %v391
      %v393 = vld [vmem:[#allocation3] sm:$0xff]
      %395 = vset.pattern.permute.xlu0 0
      %396 = vperm.xlu0 %395, %v370
      %v397 = vpop.permute.xlu0 %396
      %v399 = vmul.f32 %v392, %v397
      %v400 = vadd.f32 %v393, %v399
      %401 = vst [vmem:[#allocation3] sm:$0xff] %v400
      %402 = vst [vmem:[#allocation2] sm:$0xff] %v392
    $region41: #{tpu_custom_call.1} parent=1 // pred_fallthru
      _
    // Predicated region
    $region42: #{tpu_custom_call.1} parent=1 // pred_check
      %p403 = pneg %p70
    $region43: #{tpu_custom_call.1} parent=1 // pred_check_branch
      %405 = sbr.rel (%p403) target = $region45
    $region44: #{tpu_custom_call.1} parent=1 // pred_region
      %v406 = vld [vmem:[#allocation3] sm:$0xff]
      %v407 = vld [vmem:[#allocation11] sm:$0xff]
      %v408 = vld [vmem:[#allocation11 + $0x8] sm:$0xff]
      %v409 = vld [vmem:[#allocation11 + $0x10] sm:$0xff]
      %v410 = vld [vmem:[#allocation11 + $0x18] sm:$0xff]
      %v411 = vld [vmem:[#allocation11 + $0x20] sm:$0xff]
      %v412 = vld [vmem:[#allocation11 + $0x28] sm:$0xff]
      %v413 = vld [vmem:[#allocation11 + $0x30] sm:$0xff]
      %v414 = vld [vmem:[#allocation11 + $0x38] sm:$0xff]
      %v415 = vld [vmem:[#allocation11 + $0x40] sm:$0xff]
      %v416 = vld [vmem:[#allocation11 + $0x48] sm:$0xff]
      %v417 = vld [vmem:[#allocation11 + $0x50] sm:$0xff]
      %v418 = vld [vmem:[#allocation11 + $0x58] sm:$0xff]
      %v419 = vld [vmem:[#allocation11 + $0x60] sm:$0xff]
      %v420 = vld [vmem:[#allocation11 + $0x68] sm:$0xff]
      %v421 = vld [vmem:[#allocation11 + $0x70] sm:$0xff]
      %v422 = vld [vmem:[#allocation11 + $0x78] sm:$0xff]
      %v423 = vld [vmem:[%s5] sm:$0x1]
      %v425 = vperm.slane %v423, 0
      %427 = vmatpush.msra.mxu0 %v422
      %428 = vmatpush.msra.mxu0 %v421
      %429 = vmatpush.msra.mxu0 %v420
      %430 = vmatpush.msra.mxu0 %v419
      %431 = vmatpush.msra.mxu0 %v418
      %432 = vmatpush.msra.mxu0 %v417
      %433 = vmatpush.msra.mxu0 %v416
      %434 = vmatpush.msra.mxu0 %v415
      %435 = vmatpush.msra.mxu0 %v414
      %436 = vmatpush.msra.mxu0 %v413
      %437 = vmatpush.msra.mxu0 %v412
      %438 = vmatpush.msra.mxu0 %v411
      %439 = vmatpush.msra.mxu0 %v410
      %440 = vmatpush.msra.mxu0 %v409
      %441 = vmatpush.msra.mxu0 %v408
      %442 = vmatpush.msra.mxu0 %v407
      %443 = vmatmul.f32.gmra.mxu0 %v406
      %v444 = vpop.f32.mrf.mxu0
      %v445 = vadd.f32 %v425, %v444
      %446 = vdwg.mxu0
      %447 = vst [vmem:[#allocation12] sm:$0xff] %v445
    $region45: #{tpu_custom_call.1} parent=1 // pred_fallthru
      _
    // Predicated region
    $region46: #{tpu_custom_call.1} parent=1 // pred_check
      _
    $region47: #{tpu_custom_call.1} parent=1 // pred_check_branch
      %449 = sbr.rel (0) target = $region49
    $region48: #{tpu_custom_call.1} parent=1 // pred_region
      %451 = vsyncadd [#allocation8], 0
      %s453 = sshll.u32 [#allocation12], 4
      %s454 = int_to_ptr.vmem [resolvable:$true] %s453
      %s455 = sshll.u32 %s6, 4
      %s456 = int_to_ptr.hbm [resolvable:$true] %s455
      %458 = dma.vmem_to_hbm [thread:$0]  %s454, 128, %s456, [#allocation8]
    $region49: #{tpu_custom_call.1} parent=1 // pred_fallthru
      _
    // Predicated region
    $region50: #{tpu_custom_call.1} parent=1 // pred_check
      _
    $region51: #{tpu_custom_call.1} parent=1 // pred_check_branch
      %460 = sbr.rel (0) target = $region53
    $region52: #{tpu_custom_call.1} parent=1 // pred_region
      %462 = dma.done [#allocation8], 128
    $region53: #{tpu_custom_call.1} parent=1 // pred_fallthru
      _
    %463 = vsyncpa [#allocation7], 1
    %464 = vsyncpa [#allocation10], 1
    %465 = vsyncpa [#allocation8], 1

</llo_original>
